<compile_context>
chip_gen: v7x
topology: tpu7x:2x2x1
jax: 0.10.0
libtpu: 0.0.40
codegen_flags: <defaults>
</compile_context>

<pallas_src>
import jax
import jax.numpy as jnp
import numpy as np
from jax.experimental import pallas as pl
from jax.experimental.pallas import tpu as pltpu


# ----------------------------------------------------------------------------
# Zero-copy (aliased) path
# ----------------------------------------------------------------------------
def _noop_kernel(x_hbm_ref, o_hbm_ref):
    # Output is aliased to the input; identity needs no data movement at all.
    del x_hbm_ref, o_hbm_ref


def _identity_aliased(x: jax.Array) -> jax.Array:
    # NOTE: call sites should donate the input (jax.jit(..., donate_argnums=...))
    # to make this truly zero-cost; without donation XLA adds one defensive copy.
    return pl.pallas_call(
        _noop_kernel,
        out_shape=jax.ShapeDtypeStruct(x.shape, x.dtype),
        in_specs=[pl.BlockSpec(memory_space=pl.ANY)],
        out_specs=pl.BlockSpec(memory_space=pl.ANY),
        input_output_aliases={0: 0},
    )(x)


# ----------------------------------------------------------------------------
# Materialized copy path: one HBM -> HBM async DMA (no VMEM staging, no grid)
# ----------------------------------------------------------------------------
def _dma_copy_kernel(x_hbm_ref, o_hbm_ref, sem):
    cp = pltpu.make_async_copy(x_hbm_ref, o_hbm_ref, sem)
    cp.start()
    cp.wait()


def _identity_copy(x: jax.Array) -> jax.Array:
    if x.size == 0:
        return x
    itemsize = np.dtype(x.dtype).itemsize
    return pl.pallas_call(
        _dma_copy_kernel,
        out_shape=jax.ShapeDtypeStruct(x.shape, x.dtype),
        in_specs=[pl.BlockSpec(memory_space=pl.ANY)],
        out_specs=pl.BlockSpec(memory_space=pl.ANY),
        scratch_shapes=[pltpu.SemaphoreType.DMA(())],
        cost_estimate=pl.CostEstimate(
            flops=0,
            transcendentals=0,
            bytes_accessed=2 * x.size * itemsize,  # one read + one write pass
        ),
    )(x)


# ----------------------------------------------------------------------------
# Public wrapper: Identity.forward(x) -> x
# ----------------------------------------------------------------------------
def identity(x: jax.Array, *, materialize_copy: bool = False) -> jax.Array:
    if materialize_copy:
        return _identity_copy(x)
    return _identity_aliased(x)


if __name__ == "__main__":
    key = jax.random.PRNGKey(0)
    # Small NCHW-shaped input consistent with a conv-net feature map.
    x = jax.random.normal(key, (2, 4, 16, 16), dtype=jnp.float32)

    # Primary zero-copy aliased path.
    y = jax.block_until_ready(identity(x))
    assert y.shape == x.shape
    assert y.dtype == x.dtype
    assert bool(jnp.all(y == x))

    # Materialized single-DMA copy path (for non-donating call sites).
    y2 = jax.block_until_ready(identity(x, materialize_copy=True))
    assert y2.shape == x.shape
    assert y2.dtype == x.dtype
    assert bool(jnp.all(y2 == x))

    # Ragged total size (not a multiple of 128/1024): handled directly by the
    # DMA path with no padding or tail passes.
    x3 = jax.random.normal(jax.random.PRNGKey(1), (3, 5, 7), dtype=jnp.float32)
    y3 = jax.block_until_ready(identity(x3, materialize_copy=True))
    assert y3.shape == x3.shape
    assert bool(jnp.all(y3 == x3))

    print("KERNEL_OK")
</pallas_src>

<mosaic_0001>
module attributes {stable_mosaic.version = 11 : i64} {
  func.func @_noop_kernel(%arg0: memref<2x4x16x16xf32, #tpu.memory_space<any>>, %arg1: memref<2x4x16x16xf32, #tpu.memory_space<any>>) attributes {dimension_semantics = [], scalar_prefetch = 0 : i64, scratch_operands = 0 : i64, tpu.core_type = #tpu.core_type<tc>} {
    return
  }
}

</mosaic_0001>

<llo_original>
// kernel: tpu_custom_call.1
$region0: #{tpu_custom_call.1}
  #allocation0 [shape = 'u32[]', space=smem, size = 0x4, offset = 0x4, fixed_abs, tag = 'smem constant byte address 0x4 - core index']
  #allocation1 [shape = 'u32[144,128]{1,0:T(1,128)}', space=vmem, size = 0x12000, scoped, tag = 'internal scratch']
  %s0 = inlined_call_operand.hbm [shape: f32[2,4,16,16], index: 0, kind: input, shape index: {}, may-alias: {0,1}]
  %s1 = inlined_call_operand.hbm [shape: f32[2,4,16,16], index: 1, kind: output, shape index: {}, may-alias: {0,1}]
  %s2 = sld [smem:[#allocation0]]
  $region2: #{tpu_custom_call.1} parent=0
    _
  %s4 = ssub.s32 1, %s2
  %s5 = scalar_select 0, %s4, %s2

</llo_original>
